<compile_context>
chip_gen: v7x
topology: tpu7x:2x2x1
jax: 0.10.0
libtpu: 0.0.40
codegen_flags: <defaults>
</compile_context>

<pallas_src>
import functools

import jax
import jax.numpy as jnp
from jax.experimental import pallas as pl
from jax.experimental.pallas import tpu as pltpu

_LANES = 128
_MAX_FLAT_COLS = 8192      # caps chunk width -> at most 64 unrolled 128-lane adds
_MAX_ROW_UNROLL = 256      # caps the general (W not dividing 128) per-row unroll


def _roundup(x, m):
    return ((x + m - 1) // m) * m


def _divisors(n):
    ds = set()
    i = 1
    while i * i <= n:
        if n % i == 0:
            ds.add(i)
            ds.add(n // i)
        i += 1
    return sorted(ds)


def _make_sum_kernel(W, Dc, hc, use_chunk_roll):
    """Sums hc contiguous W-wide segments of each flat row into a (tg, W) tile."""

    def kernel(x_ref, o_ref, acc_ref):
        j = pl.program_id(1)

        @pl.when(j == 0)
        def _init():
            acc_ref[...] = jnp.zeros_like(acc_ref)

        if use_chunk_roll:
            # Full-width VPU adds over the 128-lane column chunks ...
            part = x_ref[:, 0:_LANES].astype(jnp.float32)
            for c in range(1, Dc // _LANES):
                part = part + x_ref[:, c * _LANES:(c + 1) * _LANES].astype(jnp.float32)
            # ... then fold the 128/W interleaved W-wide segments with lane
            # rotations (XLU).  Each step rotates by half of the current period,
            # so the result is independent of the roll direction convention.
            s = _LANES // 2
            while s >= W:
                part = part + pltpu.roll(part, shift=s, axis=1)
                s //= 2
            folded = part[:, 0:W]
        else:
            # General-W fallback: per-row-segment lane slices (bounded unroll).
            folded = x_ref[:, 0:W].astype(jnp.float32)
            for h in range(1, hc):
                folded = folded + x_ref[:, h * W:(h + 1) * W].astype(jnp.float32)

        acc_ref[...] += folded

        @pl.when(j == pl.num_programs(1) - 1)
        def _store():
            o_ref[...] = acc_ref[...].astype(o_ref.dtype)

    return kernel


def _pick_h_chunk(H, W, max_cols):
    """Largest H-chunk whose flat width fits max_cols (128-aligned when chunking)."""
    if H * W <= max_cols:
        return H
    cands = [hc for hc in _divisors(H)
             if hc < H and (hc * W) % _LANES == 0 and hc * W <= max_cols]
    return max(cands) if cands else H


def _pick_group_tile(G, dc_cols, itemsize, target_bytes, sublane):
    """Group-tile rows: legal (x8 / full-extent), fits the padded-VMEM budget,
    prefers >=2 grid steps (v7x dual TC), packed sublanes, then largest tile."""
    legal = [d for d in _divisors(G) if d % 8 == 0 or d == G]

    def tile_bytes(d):  # real (padded) VMEM footprint of one input tile
        return _roundup(d, sublane) * _roundup(dc_cols, _LANES) * itemsize

    fitting = [d for d in legal if tile_bytes(d) <= target_bytes] or [min(legal)]

    def score(d):
        steps = G // d
        return (
            min(steps, 2),                               # keep both v7x TCs streaming
            1 if (d % sublane == 0 or d == G) else 0,    # packed sublanes
            1 if (steps % 2 == 0 or steps == 1) else 0,  # balanced split across 2 TCs
            d,                                           # then amortize per-step overhead
        )

    return max(fitting, key=score)


@functools.partial(jax.jit, static_argnames=("dim",))
def embedding_adder(x, dim=2):
    """Pallas TPU implementation of x.sum(dim=2) for a 4D (B, C, H, W) tensor."""
    assert x.ndim == 4, "kernel specialized to 4D NCHW input"
    assert dim in (2, -2), "kernel specialized to dim=2 (H axis of NCHW)"
    B, C, H, W = x.shape

    if (not jnp.issubdtype(x.dtype, jnp.floating)) or B * C == 0 or H == 0 or W == 0:
        # TODO(synk): integer inputs (PyTorch promotes int sums to int64) and
        # zero-sized axes fall back to XLA; the Pallas path covers float dtypes.
        return jnp.sum(x, axis=2)

    G, D = B * C, H * W
    itemsize = jnp.dtype(x.dtype).itemsize
    sublane = max(8, 32 // itemsize)       # 8 for f32/i32, 16 for bf16/f16, 32 for 8-bit

    # H-chunking (trailing "arbitrary" grid axis) bounds both VMEM and unroll.
    path_a_ok = (W <= _LANES and _LANES % W == 0)
    max_cols = _MAX_FLAT_COLS if path_a_ok else _MAX_ROW_UNROLL * W
    hc = _pick_h_chunk(H, W, max_cols)
    Dc = hc * W
    nH = H // hc
    use_chunk_roll = path_a_ok and (Dc % _LANES == 0)

    if (not use_chunk_roll) and hc > _MAX_ROW_UNROLL:
        # TODO(synk): huge H with a W that neither divides 128 nor admits a
        # 128-aligned H-chunk; an MXU 0/1 fold-matrix kernel would cover this.
        return jnp.sum(x, axis=2)

    # Generation-aware budgeting (v5e/v6e: 128 MiB VMEM, v7x: 64 MiB).
    try:
        vmem_cap = int(getattr(pltpu.get_tpu_info(), "vmem_capacity_bytes", 0)) or (64 << 20)
    except Exception:  # no hardware info at trace time -> assume smallest (v7x)
        vmem_cap = 64 << 20
    target_tile_bytes = min(8 << 20, vmem_cap // 8)   # 8 MiB sits in every gen's sweet spot

    tg = _pick_group_tile(G, Dc, itemsize, target_tile_bytes, sublane)
    grid = (G // tg, nH)

    # Real (padded) VMEM need: double-buffered in/out tiles + f32 accumulator + slack.
    in_tile = _roundup(tg, sublane) * _roundup(Dc, _LANES) * itemsize
    out_tile = _roundup(tg, sublane) * _roundup(W, _LANES) * itemsize
    acc_tile = _roundup(tg, 8) * _roundup(W, _LANES) * 4
    need = 2 * (in_tile + out_tile) + acc_tile + (2 << 20)
    # Sizing above keeps `need` far below the cap; clamp to leave compiler headroom.
    vmem_limit = int(min(max(need, 16 << 20), 0.85 * vmem_cap))

    kernel = _make_sum_kernel(W, Dc, hc, use_chunk_roll)

    out_flat = pl.pallas_call(
        kernel,
        out_shape=jax.ShapeDtypeStruct((G, W), x.dtype),
        grid=grid,
        in_specs=[pl.BlockSpec((tg, Dc), lambda g, j: (g, j))],
        out_specs=pl.BlockSpec((tg, W), lambda g, j: (g, 0)),
        scratch_shapes=[pltpu.VMEM((tg, W), jnp.float32)],
        compiler_params=pltpu.CompilerParams(
            dimension_semantics=("parallel", "arbitrary"),
            vmem_limit_bytes=vmem_limit,
        ),
    )(x.reshape(G, D))

    return out_flat.reshape(B, C, W)


if __name__ == "__main__":
    key = jax.random.PRNGKey(0)
    B, C, H, W = 2, 4, 16, 16
    x = jax.random.normal(key, (B, C, H, W), dtype=jnp.float32)

    out = embedding_adder(x, dim=2)
    out = jax.block_until_ready(out)

    # correctness check vs. plain JAX reference
    ref = jnp.sum(x, axis=2)
    assert out.shape == (B, C, W)
    assert out.dtype == ref.dtype
    assert jnp.allclose(out, ref, atol=1e-5, rtol=1e-5)

    print("KERNEL_OK")
</pallas_src>

<mosaic_0001>
module attributes {stable_mosaic.version = 11 : i64} {
  func.func @kernel(%arg0: i32, %arg1: i32, %arg2: memref<8x256xf32, #tpu.memory_space<vmem>>, %arg3: memref<8x16xf32, #tpu.memory_space<vmem>>, %arg4: memref<8x16xf32, #tpu.memory_space<vmem>>) attributes {dimension_semantics = [#tpu.dimension_semantics<parallel>, #tpu.dimension_semantics<arbitrary>], iteration_bounds = array<i64: 1, 1>, scalar_prefetch = 0 : i64, scratch_operands = 1 : i64, tpu.core_type = #tpu.core_type<tc>, window_params = [{transform_indices = @transform_0, window_bounds = array<i64: 8, 256>}, {transform_indices = @transform_1, window_bounds = array<i64: 8, 16>}]} {
    %c0_i32 = arith.constant 0 : i32
    %0 = arith.cmpi eq, %arg1, %c0_i32 : i32
    %1 = arith.extui %0 : i1 to i32
    %c0_i32_0 = arith.constant 0 : i32
    %2 = arith.cmpi ne, %1, %c0_i32_0 : i32
    scf.if %2 {
      %cst = arith.constant 0.000000e+00 : f32
      %19 = vector.broadcast %cst : f32 to vector<8x16xf32>
      %c0_9 = arith.constant 0 : index
      %c0_10 = arith.constant 0 : index
      %20 = vector.load %arg4[%c0_9, %c0_10] : memref<8x16xf32, #tpu.memory_space<vmem>>, vector<8x16xf32>
      tpu.vector_store %arg4[%c0_9, %c0_10], %19 {strides = array<i32>} : memref<8x16xf32, #tpu.memory_space<vmem>>, vector<8x16xf32>,
    } else {
    }
    %c0 = arith.constant 0 : index
    %c0_1 = arith.constant 0 : index
    %3 = vector.load %arg2[%c0, %c0_1] : memref<8x256xf32, #tpu.memory_space<vmem>>, vector<8x128xf32>
    %c0_2 = arith.constant 0 : index
    %c128 = arith.constant 128 : index
    %4 = vector.load %arg2[%c0_2, %c128] : memref<8x256xf32, #tpu.memory_space<vmem>>, vector<8x128xf32>
    %5 = arith.addf %3, %4 : vector<8x128xf32>
    %c64_i32 = arith.constant 64 : i32
    %6 = tpu.dynamic_rotate %5 by %c64_i32 dim 1 : vector<8x128xf32>, i32 -> vector<8x128xf32>
    %7 = arith.addf %5, %6 : vector<8x128xf32>
    %c32_i32 = arith.constant 32 : i32
    %8 = tpu.dynamic_rotate %7 by %c32_i32 dim 1 : vector<8x128xf32>, i32 -> vector<8x128xf32>
    %9 = arith.addf %7, %8 : vector<8x128xf32>
    %c16_i32 = arith.constant 16 : i32
    %10 = tpu.dynamic_rotate %9 by %c16_i32 dim 1 : vector<8x128xf32>, i32 -> vector<8x128xf32>
    %11 = arith.addf %9, %10 : vector<8x128xf32>
    %12 = vector.extract_strided_slice %11 {offsets = [0, 0], sizes = [8, 16], strides = [1, 1]} : vector<8x128xf32> to vector<8x16xf32>
    %c0_3 = arith.constant 0 : index
    %c0_4 = arith.constant 0 : index
    %13 = vector.load %arg4[%c0_3, %c0_4] : memref<8x16xf32, #tpu.memory_space<vmem>>, vector<8x16xf32>
    %14 = arith.addf %13, %12 : vector<8x16xf32>
    %c0_5 = arith.constant 0 : index
    %c0_6 = arith.constant 0 : index
    %15 = vector.load %arg4[%c0_5, %c0_6] : memref<8x16xf32, #tpu.memory_space<vmem>>, vector<8x16xf32>
    tpu.vector_store %arg4[%c0_5, %c0_6], %14 {strides = array<i32>} : memref<8x16xf32, #tpu.memory_space<vmem>>, vector<8x16xf32>,
    %c0_i32_7 = arith.constant 0 : i32
    %16 = arith.cmpi eq, %arg1, %c0_i32_7 : i32
    %17 = arith.extui %16 : i1 to i32
    %c0_i32_8 = arith.constant 0 : i32
    %18 = arith.cmpi ne, %17, %c0_i32_8 : i32
    scf.if %18 {
      %c0_9 = arith.constant 0 : index
      %c0_10 = arith.constant 0 : index
      %19 = vector.load %arg4[%c0_9, %c0_10] : memref<8x16xf32, #tpu.memory_space<vmem>>, vector<8x16xf32>
      %c0_11 = arith.constant 0 : index
      %c0_12 = arith.constant 0 : index
      %20 = vector.load %arg3[%c0_11, %c0_12] : memref<8x16xf32, #tpu.memory_space<vmem>>, vector<8x16xf32>
      tpu.vector_store %arg3[%c0_11, %c0_12], %19 {strides = array<i32>} : memref<8x16xf32, #tpu.memory_space<vmem>>, vector<8x16xf32>,
    } else {
    }
    return
  }
  func.func @transform_0(%arg0: i32, %arg1: i32) -> (i32, i32) {
    %c0_i32 = arith.constant 0 : i32
    return %arg0, %arg1 : i32, i32
  }
  func.func @transform_1(%arg0: i32, %arg1: i32) -> (i32, i32) {
    %c0_i32 = arith.constant 0 : i32
    %c0_i32_0 = arith.constant 0 : i32
    return %arg0, %c0_i32 : i32, i32
  }
}

</mosaic_0001>

<llo_original>
// kernel: embedding_adder.1
$region0: #{embedding_adder.1}
  #allocation0 [shape = 'u32[]', space=smem, size = 0x4, offset = 0x4, fixed_abs, tag = 'smem constant byte address 0x4 - core index']
  #allocation1 [shape = 'u32[144,128]{1,0:T(1,128)}', space=vmem, size = 0x12000, scoped, tag = 'internal scratch']
  #allocation2 [shape = 'f32[8,16]{1,0:T(8,128)}', space=vmem, size = 0x1000, scoped, tag = 'scratch operand']
  %s0 = inlined_call_operand.vmem [shape: f32[8,256], index: 0, kind: input, shape index: {}]
  %s1 = inlined_call_operand.hbm [shape: f32[8,16], index: 1, kind: output, shape index: {}]
  %s2 = sld [smem:[#allocation0]]
  $region22: #{embedding_adder.1} parent=0
    _
  %s4 = ssub.s32 1, %s2
  %s5 = scalar_select 0, %s4, %s2
  $region1: #{embedding_adder.1} parent=0
    #allocation3 [shape = 'u8[4096]{0}', space=vmem, size = 0x1000, scoped, tag = 'output window, operand 0, single buffered']
    #allocation4 [shape = 's32[1]{0}', space=sflag, size = 0x4, scoped, tag = 'scoped memory for embedding_adder.1']
    %6 = vsyncpa [#allocation4], 0
    // Predicated region
    $region2: #{embedding_adder.1} parent=1 // pred_check
      _
    $region3: #{embedding_adder.1} parent=1 // pred_check_branch
      %8 = sbr.rel (0) target = $region5
    $region4: #{embedding_adder.1} parent=1 // pred_region
      _
    $region5: #{embedding_adder.1} parent=1 // pred_fallthru
      _
    %p9 = scmp.eq.s32.totalorder 0, 0
    // Predicated region
    $region6: #{embedding_adder.1} parent=1 // pred_check
      %p10 = pneg %p9
    $region7: #{embedding_adder.1} parent=1 // pred_check_branch
      %12 = sbr.rel (%p10) target = $region9
    $region8: #{embedding_adder.1} parent=1 // pred_region
      %vm13 = vcmask 130048
      %14 = vst.msk [vmem:[#allocation2] sm:$0xff] %vm13, 0.0
    $region9: #{embedding_adder.1} parent=1 // pred_fallthru
      _
    %v15 = vld [vmem:[%s0] sm:$0xff]
    %v16 = vld [vmem:[%s0 + $0x8] sm:$0xff]
    %v17 = vadd.f32 %v15, %v16
    %18 = vrot.lane.b32.xlu0 %v17, 64
    %v19 = vpop.permute.xlu0 %18
    %v20 = vadd.f32 %v17, %v19
    %21 = vrot.lane.b32.xlu0 %v20, 32
    %v22 = vpop.permute.xlu0 %21
    %v23 = vadd.f32 %v20, %v22
    %24 = vrot.lane.b32.xlu0 %v23, 16
    %v25 = vpop.permute.xlu0 %24
    %v26 = vadd.f32 %v23, %v25
    %v27 = vld [vmem:[#allocation2] sm:$0xff]
    %v28 = vadd.f32 %v27, %v26
    %vm29 = vcmask 130048
    %30 = vst.msk [vmem:[#allocation2] sm:$0xff] %vm29, %v28
    // Predicated region
    $region10: #{embedding_adder.1} parent=1 // pred_check
      %p31 = pneg %p9
    $region11: #{embedding_adder.1} parent=1 // pred_check_branch
      %33 = sbr.rel (%p31) target = $region13
    $region12: #{embedding_adder.1} parent=1 // pred_region
      %v34 = vld [vmem:[#allocation2] sm:$0xff]
      %35 = vst.msk [vmem:[#allocation3] sm:$0xff] %vm29, %v34
    $region13: #{embedding_adder.1} parent=1 // pred_fallthru
      _
    // Predicated region
    $region14: #{embedding_adder.1} parent=1 // pred_check
      _
    $region15: #{embedding_adder.1} parent=1 // pred_check_branch
      %37 = sbr.rel (0) target = $region17
    $region16: #{embedding_adder.1} parent=1 // pred_region
      %s39 = ssub.s32 128, 128
      %40 = vsyncadd [#allocation4], %s39
      %s42 = sshll.u32 [#allocation3], 4
      %s43 = int_to_ptr.vmem [resolvable:$true] %s42
      %45 = dma.vmem_to_hbm [thread:$0]  %s43, 128, %s1, [#allocation4]
    $region17: #{embedding_adder.1} parent=1 // pred_fallthru
      _
    // Predicated region
    $region18: #{embedding_adder.1} parent=1 // pred_check
      _
    $region19: #{embedding_adder.1} parent=1 // pred_check_branch
      %47 = sbr.rel (0) target = $region21
    $region20: #{embedding_adder.1} parent=1 // pred_region
      %48 = dma.done [#allocation4], 128
    $region21: #{embedding_adder.1} parent=1 // pred_fallthru
      _
    %49 = vsyncpa [#allocation4], 1

</llo_original>
